<compile_context>
chip_gen: v6e
topology: v6e:2x2x1
jax: 0.10.0
libtpu: 0.0.40
codegen_flags: <defaults>
</compile_context>

<pallas_src>
import jax
import jax.numpy as jnp
from jax import lax
from jax.experimental import pallas as pl
from jax.experimental.pallas import tpu as pltpu


_VMEM = pltpu.MemorySpace.VMEM
_VPU_K_THRESHOLD = 8   # TODO(synk): re-tune per MXU generation (v5e vs v6e/v7x)
_LANE = 128


def _project_f32(x, mask):
    """State-independent projection x @ mask, accumulated in f32."""
    n_in = x.shape[-1]
    if n_in <= _VPU_K_THRESHOLD:
        # Tiny K: unrolled broadcast-FMAs over the whole slab beat a single
        # sub-tile MXU op whose result-FIFO drain cannot be hidden.
        acc = jnp.zeros((x.shape[0], mask.shape[-1]), jnp.float32)
        for k in range(n_in):  # static unroll; n_in is a compile-time constant
            acc = acc + (x[:, k:k + 1].astype(jnp.float32)
                         * mask[k:k + 1, :].astype(jnp.float32))
        return acc
    return jnp.dot(x, mask, preferred_element_type=jnp.float32)


def _pad_lanes(a, multiple=_LANE):
    """Zero-pad the last dim to a multiple of `multiple` (lane-dense stores)."""
    pad = (-a.shape[-1]) % multiple
    if pad:
        a = jnp.pad(a, [(0, 0)] * (a.ndim - 1) + [(0, pad)])
    return a


def _choose_chunk(T, max_ct=8):
    for ct in range(min(T, max_ct), 0, -1):
        if T % ct == 0:
            return ct
    return 1


# --------------------------------------------------------------------------
# Single step:  hardtanh(x @ mask + prev_output)
# --------------------------------------------------------------------------
def _dfr_cell_kernel(x_ref, mask_ref, prev_ref, out_ref):
    vec = _project_f32(x_ref[...], mask_ref[...])
    out = jnp.clip(vec + prev_ref[...].astype(jnp.float32), -1.0, 1.0)
    out_ref[...] = out.astype(out_ref.dtype)


def parallel_dfr_cell(x, mask, prev_output):
    """Single forward step: hardtanh(x @ mask + prev_output)."""
    B, n_in = x.shape
    n_in2, n_hidden = mask.shape
    assert n_in == n_in2
    assert prev_output.shape == (B, n_hidden)

    mask_p = _pad_lanes(mask)
    prev_p = _pad_lanes(prev_output)
    n_hp = mask_p.shape[-1]

    out = pl.pallas_call(
        _dfr_cell_kernel,
        out_shape=jax.ShapeDtypeStruct((B, n_hp), prev_output.dtype),
        in_specs=[
            pl.BlockSpec(memory_space=_VMEM),   # x
            pl.BlockSpec(memory_space=_VMEM),   # mask (lane-padded)
            pl.BlockSpec(memory_space=_VMEM),   # prev_output (lane-padded)
        ],
        out_specs=pl.BlockSpec(memory_space=_VMEM),
    )(x, mask_p, prev_p)
    return out[:, :n_hidden]


# --------------------------------------------------------------------------
# Fused recurrence over T timesteps (one pallas_call, T-chunked grid)
# --------------------------------------------------------------------------
def _dfr_seq_kernel(xs_ref, mask_ref, prev_ref, out_ref, state_ref, vecx_ref):
    # xs_ref:   (CT*B, n_in)   chunk of flattened inputs
    # mask_ref: (n_in, n_hp)
    # prev_ref: (B, n_hp)      initial state (only used at chunk 0)
    # out_ref:  (CT*B, n_hp)   chunk of outputs
    # state_ref:(B, n_hp) f32  recurrent state, persists across grid steps
    # vecx_ref: (CT*B, n_hp) f32  hoisted projection for this chunk
    @pl.when(pl.program_id(0) == 0)
    def _():
        state_ref[...] = prev_ref[...].astype(jnp.float32)

    # Hoisted, state-independent projection: one slab op per chunk.
    vecx_ref[...] = _project_f32(xs_ref[...], mask_ref[...])

    B = prev_ref.shape[0]
    CT = xs_ref.shape[0] // B

    def body(t, state):
        row = pl.multiple_of(t * B, B)
        v = vecx_ref[pl.ds(row, B), :]
        new = jnp.clip(v + state, -1.0, 1.0)
        stored = new.astype(out_ref.dtype)
        out_ref[pl.ds(row, B), :] = stored
        # Feed back the stored-precision value (matches the PyTorch recurrence).
        return stored.astype(jnp.float32)

    state_ref[...] = lax.fori_loop(0, CT, body, state_ref[...],
                                   unroll=min(CT, 8))


def parallel_dfr_sequence(xs, mask, prev_output):
    """Apply the cell over T timesteps in one kernel.

    xs: (T, B, n_in) -> returns (T, B, n_hidden), the per-step outputs
    (out[-1] is the final state).
    """
    T, B, n_in = xs.shape
    n_in2, n_hidden = mask.shape
    assert n_in == n_in2
    assert prev_output.shape == (B, n_hidden)

    mask_p = _pad_lanes(mask)
    prev_p = _pad_lanes(prev_output)
    n_hp = mask_p.shape[-1]

    # Wrapper-side flatten: the kernel sees a clean (T*B, n_in) slab.
    xs_flat = xs.reshape(T * B, n_in)

    CT = _choose_chunk(T)
    if (CT * B) % 8 != 0:       # keep block sublane dim (8,128)-legal
        CT = T                  # fall back to a single full-extent chunk
    n_chunks = T // CT

    grid_spec = pltpu.PrefetchScalarGridSpec(
        num_scalar_prefetch=0,
        grid=(n_chunks,),
        in_specs=[
            pl.BlockSpec((CT * B, n_in), lambda c: (c, 0)),   # xs chunk
            pl.BlockSpec((n_in, n_hp), lambda c: (0, 0)),     # mask (resident)
            pl.BlockSpec((B, n_hp), lambda c: (0, 0)),        # initial state
        ],
        out_specs=pl.BlockSpec((CT * B, n_hp), lambda c: (c, 0)),
        scratch_shapes=[
            pltpu.VMEM((B, n_hp), jnp.float32),        # recurrent state
            pltpu.VMEM((CT * B, n_hp), jnp.float32),   # hoisted projection
        ],
    )

    out = pl.pallas_call(
        _dfr_seq_kernel,
        out_shape=jax.ShapeDtypeStruct((T * B, n_hp), prev_output.dtype),
        grid_spec=grid_spec,
        compiler_params=pltpu.CompilerParams(
            dimension_semantics=("arbitrary",)),   # recurrence: sequential chunks
    )(xs_flat, mask_p, prev_p)

    return out.reshape(T, B, n_hp)[:, :, :n_hidden]


if __name__ == "__main__":
    key = jax.random.PRNGKey(0)
    (k_mask, k_x, k_prev, k_seq, k_mask32, k_prev32) = jax.random.split(key, 6)

    batch = 8
    n_in = 4
    n_hidden = 128      # lane-dense hidden dim
    T = 16

    # nn.init.uniform_(mask, a=-0.5, b=0.5)
    mask = jax.random.uniform(k_mask, (n_in, n_hidden), dtype=jnp.float32,
                              minval=-0.5, maxval=0.5)
    x = jax.random.normal(k_x, (batch, n_in), dtype=jnp.float32)
    prev_output = jax.random.normal(k_prev, (batch, n_hidden), dtype=jnp.float32)
    xs = jax.random.normal(k_seq, (T, batch, n_in), dtype=jnp.float32)

    # ----- pure-JAX references -----
    ref_step = jnp.clip(jnp.dot(x, mask) + prev_output, -1.0, 1.0)

    def _scan_step(m):
        def f(state, x_t):
            new = jnp.clip(jnp.dot(x_t, m) + state, -1.0, 1.0)
            return new, new
        return f

    _, ref_seq = lax.scan(_scan_step(mask), prev_output, xs)

    # ----- single-step kernel -----
    out_step = jax.block_until_ready(parallel_dfr_cell(x, mask, prev_output))
    assert out_step.shape == (batch, n_hidden)
    assert jnp.allclose(out_step, ref_step, atol=1e-5), "single-step mismatch"

    # ----- fused recurrence kernel -----
    out_seq = jax.block_until_ready(parallel_dfr_sequence(xs, mask, prev_output))
    assert out_seq.shape == (T, batch, n_hidden)
    assert jnp.allclose(out_seq, ref_seq, atol=1e-5), "sequence mismatch"

    # ----- non-lane-dense hidden (n_hidden=32) uses the lane-padded path -----
    mask32 = jax.random.uniform(k_mask32, (n_in, 32), dtype=jnp.float32,
                                minval=-0.5, maxval=0.5)
    prev32 = jax.random.normal(k_prev32, (batch, 32), dtype=jnp.float32)
    ref32 = jnp.clip(jnp.dot(x, mask32) + prev32, -1.0, 1.0)
    out32 = jax.block_until_ready(parallel_dfr_cell(x, mask32, prev32))
    assert out32.shape == (batch, 32)
    assert jnp.allclose(out32, ref32, atol=1e-5), "n_hidden=32 step mismatch"

    _, ref_seq32 = lax.scan(_scan_step(mask32), prev32, xs)
    out_seq32 = jax.block_until_ready(parallel_dfr_sequence(xs, mask32, prev32))
    assert out_seq32.shape == (T, batch, 32)
    assert jnp.allclose(out_seq32, ref_seq32, atol=1e-5), "n_hidden=32 seq mismatch"

    print("KERNEL_OK")
</pallas_src>

<mosaic_0001>
module attributes {stable_mosaic.version = 11 : i64} {
  func.func @_dfr_cell_kernel(%arg0: memref<8x4xf32, #tpu.memory_space<vmem>>, %arg1: memref<4x128xf32, #tpu.memory_space<vmem>>, %arg2: memref<8x128xf32, #tpu.memory_space<vmem>>, %arg3: memref<8x128xf32, #tpu.memory_space<vmem>>) attributes {dimension_semantics = [], scalar_prefetch = 0 : i64, scratch_operands = 0 : i64, tpu.core_type = #tpu.core_type<tc>} {
    %c0 = arith.constant 0 : index
    %c0_0 = arith.constant 0 : index
    %0 = vector.load %arg0[%c0, %c0_0] : memref<8x4xf32, #tpu.memory_space<vmem>>, vector<8x4xf32>
    %c0_1 = arith.constant 0 : index
    %c0_2 = arith.constant 0 : index
    %1 = vector.load %arg1[%c0_1, %c0_2] : memref<4x128xf32, #tpu.memory_space<vmem>>, vector<4x128xf32>
    %cst = arith.constant 0.000000e+00 : f32
    %2 = vector.broadcast %cst : f32 to vector<8x128xf32>
    %3 = vector.extract_strided_slice %0 {offsets = [0, 0], sizes = [8, 1], strides = [1, 1]} : vector<8x4xf32> to vector<8x1xf32>
    %4 = vector.extract_strided_slice %1 {offsets = [0, 0], sizes = [1, 128], strides = [1, 1]} : vector<4x128xf32> to vector<1x128xf32>
    %5 = vector.broadcast %3 : vector<8x1xf32> to vector<8x128xf32>
    %6 = vector.broadcast %4 : vector<1x128xf32> to vector<8x128xf32>
    %7 = arith.mulf %5, %6 : vector<8x128xf32>
    %8 = arith.addf %2, %7 : vector<8x128xf32>
    %9 = vector.extract_strided_slice %0 {offsets = [0, 1], sizes = [8, 1], strides = [1, 1]} : vector<8x4xf32> to vector<8x1xf32>
    %10 = vector.extract_strided_slice %1 {offsets = [1, 0], sizes = [1, 128], strides = [1, 1]} : vector<4x128xf32> to vector<1x128xf32>
    %11 = vector.broadcast %9 : vector<8x1xf32> to vector<8x128xf32>
    %12 = vector.broadcast %10 : vector<1x128xf32> to vector<8x128xf32>
    %13 = arith.mulf %11, %12 : vector<8x128xf32>
    %14 = arith.addf %8, %13 : vector<8x128xf32>
    %15 = vector.extract_strided_slice %0 {offsets = [0, 2], sizes = [8, 1], strides = [1, 1]} : vector<8x4xf32> to vector<8x1xf32>
    %16 = vector.extract_strided_slice %1 {offsets = [2, 0], sizes = [1, 128], strides = [1, 1]} : vector<4x128xf32> to vector<1x128xf32>
    %17 = vector.broadcast %15 : vector<8x1xf32> to vector<8x128xf32>
    %18 = vector.broadcast %16 : vector<1x128xf32> to vector<8x128xf32>
    %19 = arith.mulf %17, %18 : vector<8x128xf32>
    %20 = arith.addf %14, %19 : vector<8x128xf32>
    %21 = vector.extract_strided_slice %0 {offsets = [0, 3], sizes = [8, 1], strides = [1, 1]} : vector<8x4xf32> to vector<8x1xf32>
    %22 = vector.extract_strided_slice %1 {offsets = [3, 0], sizes = [1, 128], strides = [1, 1]} : vector<4x128xf32> to vector<1x128xf32>
    %23 = vector.broadcast %21 : vector<8x1xf32> to vector<8x128xf32>
    %24 = vector.broadcast %22 : vector<1x128xf32> to vector<8x128xf32>
    %25 = arith.mulf %23, %24 : vector<8x128xf32>
    %26 = arith.addf %20, %25 : vector<8x128xf32>
    %c0_3 = arith.constant 0 : index
    %c0_4 = arith.constant 0 : index
    %27 = vector.load %arg2[%c0_3, %c0_4] : memref<8x128xf32, #tpu.memory_space<vmem>>, vector<8x128xf32>
    %28 = arith.addf %26, %27 : vector<8x128xf32>
    %cst_5 = arith.constant -1.000000e+00 : f32
    %cst_6 = arith.constant 1.000000e+00 : f32
    %29 = vector.broadcast %cst_5 : f32 to vector<8x128xf32>
    %30 = arith.maximumf %29, %28 : vector<8x128xf32>
    %31 = vector.broadcast %cst_6 : f32 to vector<8x128xf32>
    %32 = arith.minimumf %31, %30 : vector<8x128xf32>
    %c0_7 = arith.constant 0 : index
    %c0_8 = arith.constant 0 : index
    %33 = vector.load %arg3[%c0_7, %c0_8] : memref<8x128xf32, #tpu.memory_space<vmem>>, vector<8x128xf32>
    tpu.vector_store %arg3[%c0_7, %c0_8], %32 {strides = array<i32>} : memref<8x128xf32, #tpu.memory_space<vmem>>, vector<8x128xf32>,
    return
  }
}

</mosaic_0001>

<llo_original>
// kernel: tpu_custom_call.1
$region0: #{tpu_custom_call.1}
  #allocation0 [shape = 'u32[]', space=smem, size = 0x4, offset = 0x4, fixed_abs, tag = 'smem constant byte address 0x4 - core index']
  #allocation1 [shape = 'u32[144,128]{1,0:T(1,128)}', space=vmem, size = 0x12000, scoped, tag = 'internal scratch']
  %s0 = inlined_call_operand.vmem [shape: f32[8,4], index: 0, kind: input, shape index: {}]
  %s1 = inlined_call_operand.vmem [shape: f32[4,128], index: 1, kind: input, shape index: {}]
  %s2 = inlined_call_operand.vmem [shape: f32[8,128], index: 2, kind: input, shape index: {}]
  %s3 = inlined_call_operand.hbm [shape: f32[8,128], index: 3, kind: output, shape index: {}]
  %s4 = sld [smem:[#allocation0]]
  $region22: #{tpu_custom_call.1} parent=0
    _
  %s6 = ssub.s32 1, %s4
  %s7 = scalar_select 0, %s6, %s4
  $region1: #{tpu_custom_call.1} parent=0
    #allocation2 [shape = 'u8[4096]{0}', space=vmem, size = 0x1000, scoped, tag = 'output window, operand 0, single buffered']
    #allocation3 [shape = 's32[1]{0}', space=sflag, size = 0x4, scoped, tag = 'scoped memory for tpu_custom_call.1']
    %8 = vsyncpa [#allocation3], 0
    // Predicated region
    $region2: #{tpu_custom_call.1} parent=1 // pred_check
      _
    $region3: #{tpu_custom_call.1} parent=1 // pred_check_branch
      %10 = sbr.rel (0) target = $region5
    $region4: #{tpu_custom_call.1} parent=1 // pred_region
      _
    $region5: #{tpu_custom_call.1} parent=1 // pred_fallthru
      _
    // Predicated region
    $region6: #{tpu_custom_call.1} parent=1 // pred_check
      _
    $region7: #{tpu_custom_call.1} parent=1 // pred_check_branch
      %12 = sbr.rel (0) target = $region9
    $region8: #{tpu_custom_call.1} parent=1 // pred_region
      _
    $region9: #{tpu_custom_call.1} parent=1 // pred_fallthru
      _
    // Predicated region
    $region10: #{tpu_custom_call.1} parent=1 // pred_check
      _
    $region11: #{tpu_custom_call.1} parent=1 // pred_check_branch
      %14 = sbr.rel (0) target = $region13
    $region12: #{tpu_custom_call.1} parent=1 // pred_region
      _
    $region13: #{tpu_custom_call.1} parent=1 // pred_fallthru
      _
    %v15 = vld [vmem:[%s0] sm:$0xff]
    %v16 = vld [vmem:[%s1] sm:$0xf]
    %18 = vset.pattern.permute.xlu0 0
    %19 = vperm.xlu0 %18, %v15
    %v20 = vpop.permute.xlu0 %19
    %v22 = vlaneseq
    %v23 = vshrl.u32 %v22, 7
    %v24 = vsub.s32 0, %v23
    %v25 = vrot.slane %v16, %v24
    %v26 = vmul.f32 %v20, %v25
    %v27 = vadd.f32 %v26, 0.0
    %28 = vset.pattern.permute.xlu0 1
    %29 = vperm.xlu0 %28, %v15
    %v30 = vpop.permute.xlu0 %29
    %v32 = vlaneseq
    %v33 = vshrl.u32 %v32, 7
    %v34 = vsub.s32 1, %v33
    %v35 = vrot.slane %v16, %v34
    %v36 = vmul.f32 %v30, %v35
    %v37 = vadd.f32 %v27, %v36
    %38 = vset.pattern.permute.xlu0 2
    %39 = vperm.xlu0 %38, %v15
    %v40 = vpop.permute.xlu0 %39
    %v42 = vlaneseq
    %v43 = vshrl.u32 %v42, 7
    %v44 = vsub.s32 2, %v43
    %v45 = vrot.slane %v16, %v44
    %v46 = vmul.f32 %v40, %v45
    %v47 = vadd.f32 %v37, %v46
    %48 = vset.pattern.permute.xlu0 3
    %49 = vperm.xlu0 %48, %v15
    %v50 = vpop.permute.xlu0 %49
    %v52 = vlaneseq
    %v53 = vshrl.u32 %v52, 7
    %v54 = vsub.s32 3, %v53
    %v55 = vrot.slane %v16, %v54
    %v56 = vmul.f32 %v50, %v55
    %v57 = vadd.f32 %v47, %v56
    %v58 = vld [vmem:[%s2] sm:$0xff]
    %v59 = vadd.f32 %v57, %v58
    %v60 = vmax.f32 %v59, -1.0
    %v61 = vmin.f32 %v60, 1.0
    %62 = vst [vmem:[#allocation2] sm:$0xff] %v61
    // Predicated region
    $region14: #{tpu_custom_call.1} parent=1 // pred_check
      _
    $region15: #{tpu_custom_call.1} parent=1 // pred_check_branch
      %64 = sbr.rel (0) target = $region17
    $region16: #{tpu_custom_call.1} parent=1 // pred_region
      %s66 = ssub.s32 128, 128
      %67 = vsyncadd [#allocation3], %s66
      %s69 = sshll.u32 [#allocation2], 4
      %s70 = int_to_ptr.vmem [resolvable:$true] %s69
      %72 = dma.vmem_to_hbm [thread:$0]  %s70, 128, %s3, [#allocation3]
    $region17: #{tpu_custom_call.1} parent=1 // pred_fallthru
      _
    // Predicated region
    $region18: #{tpu_custom_call.1} parent=1 // pred_check
      _
    $region19: #{tpu_custom_call.1} parent=1 // pred_check_branch
      %74 = sbr.rel (0) target = $region21
    $region20: #{tpu_custom_call.1} parent=1 // pred_region
      %75 = dma.done [#allocation3], 128
    $region21: #{tpu_custom_call.1} parent=1 // pred_fallthru
      _
    %76 = vsyncpa [#allocation3], 1

</llo_original>
